<compile_context>
chip_gen: v5e
topology: v5e:2x2
jax: 0.10.0
libtpu: 0.0.40
codegen_flags: <defaults>
</compile_context>

<pallas_src>
import functools

import jax
import jax.numpy as jnp
from jax.experimental import pallas as pl
from jax.experimental.pallas import tpu as pltpu


_VREG_ROWS = 8
_VREG_LANES = 128
_TARGET_BLOCK_BYTES = 2 * 1024 * 1024  # ~2 MiB blocks: near HBM roofline, safe
                                        # for v5e's 16 MiB default scoped VMEM.


def _pick_row_tile(n_rows, n_cols, elem_bytes, target_bytes=_TARGET_BLOCK_BYTES):
    """Largest 8-aligned row tile whose block is ~target_bytes (or all rows)."""
    rows = target_bytes // max(1, n_cols * elem_bytes)
    rows = (rows // _VREG_ROWS) * _VREG_ROWS
    if rows < _VREG_ROWS:
        rows = _VREG_ROWS
    if rows >= n_rows:
        return n_rows          # full-extent block: always a legal block shape
    return rows                # multiple of 8, grid = cdiv(n_rows, rows)


def _stats_kernel(x_ref, sum_ref, sq_ref, *, rows_per_block, n_rows, need_mask):
    """Per-block partial sum / sum-of-squares, broadcast into a lane-dense row."""
    xv = x_ref[...].astype(jnp.float32)                    # (TR, HW)
    if need_mask:
        # Boundary block overhangs the array: zero undefined rows so they
        # don't pollute the statistics.
        row = (pl.program_id(0) * rows_per_block
               + jax.lax.broadcasted_iota(jnp.int32, xv.shape, 0))
        xv = jnp.where(row < n_rows, xv, 0.0)
    s = jnp.sum(xv)
    ss = jnp.sum(xv * xv)
    sum_ref[...] = jnp.full(sum_ref.shape, s, jnp.float32)
    sq_ref[...] = jnp.full(sq_ref.shape, ss, jnp.float32)


def _norm_kernel(x_ref, scale_ref, shift_ref, o_ref):
    """y = x * scale + shift  (mean / inv_std / weight / bias pre-folded per row)."""
    xv = x_ref[...].astype(jnp.float32)                    # (TR, HW)
    y = xv * scale_ref[...] + shift_ref[...]               # (TR, 1) broadcasts
    o_ref[...] = y.astype(o_ref.dtype)


def batch_layer_norm(x, weight, bias, eps=1e-5):
    """Pallas TPU forward of BatchLayerNorm (affine=True, training-mode stats)."""
    N, C, H, W = x.shape
    HW = H * W
    R = N * C
    elem_bytes = max(int(jnp.dtype(x.dtype).itemsize), 4)   # budget f32 work set

    x2 = x.reshape(R, HW)                                    # free (row-major)

    # ---- Pass 1: per-block partial (sum, sumsq) on a fully parallel grid ----
    tr1 = _pick_row_tile(R, HW, elem_bytes)
    g1 = pl.cdiv(R, tr1)
    need_mask = (R % tr1) != 0

    part_shape = jax.ShapeDtypeStruct((g1, 1, _VREG_LANES), jnp.float32)
    part_spec = pl.BlockSpec((1, 1, _VREG_LANES), lambda i: (i, 0, 0))

    sum_part, sq_part = pl.pallas_call(
        functools.partial(_stats_kernel,
                          rows_per_block=tr1, n_rows=R, need_mask=need_mask),
        out_shape=(part_shape, part_shape),
        grid_spec=pltpu.PrefetchScalarGridSpec(
            num_scalar_prefetch=0,
            grid=(g1,),
            in_specs=[pl.BlockSpec((tr1, HW), lambda i: (i, 0))],
            out_specs=(part_spec, part_spec),
        ),
        compiler_params=pltpu.CompilerParams(
            dimension_semantics=("parallel",)),
    )(x2)

    # ---- Tiny scalar glue: stats -> per-row scale / shift -------------------
    n_total = jnp.float32(R * HW)
    total_sum = jnp.sum(sum_part[:, 0, 0])
    total_sq = jnp.sum(sq_part[:, 0, 0])
    mean = total_sum / n_total
    var = jnp.maximum(total_sq / n_total - mean * mean, 0.0)  # biased variance
    inv_std = jax.lax.rsqrt(var + jnp.float32(eps))

    scale_c = inv_std * weight.astype(jnp.float32)             # (C,)
    shift_c = bias.astype(jnp.float32) - mean * scale_c        # (C,)
    scale_r = jnp.tile(scale_c, N).reshape(R, 1)               # row r -> channel r % C
    shift_r = jnp.tile(shift_c, N).reshape(R, 1)

    # ---- Pass 2: normalize + affine as a single FMA --------------------------
    tr2 = _pick_row_tile(R, HW, elem_bytes)
    g2 = pl.cdiv(R, tr2)

    y2 = pl.pallas_call(
        _norm_kernel,
        out_shape=jax.ShapeDtypeStruct((R, HW), x.dtype),
        grid_spec=pltpu.PrefetchScalarGridSpec(
            num_scalar_prefetch=0,
            grid=(g2,),
            in_specs=[
                pl.BlockSpec((tr2, HW), lambda i: (i, 0)),     # x
                pl.BlockSpec((tr2, 1), lambda i: (i, 0)),      # per-row scale
                pl.BlockSpec((tr2, 1), lambda i: (i, 0)),      # per-row shift
            ],
            out_specs=pl.BlockSpec((tr2, HW), lambda i: (i, 0)),
        ),
        compiler_params=pltpu.CompilerParams(
            dimension_semantics=("parallel",)),
    )(x2, scale_r, shift_r)

    return y2.reshape(N, C, H, W)


def batch_layer_norm_ref(x, weight, bias, eps=1e-5):
    """Pure-JAX reference for correctness checking."""
    mean = jnp.mean(x)
    var = jnp.mean((x - mean) ** 2)
    y = (x - mean) / jnp.sqrt(var + eps)
    return y * weight.reshape(1, -1, 1, 1) + bias.reshape(1, -1, 1, 1)


if __name__ == "__main__":
    key = jax.random.PRNGKey(0)
    k_x, k_w = jax.random.split(key)

    N, C, H, W = 2, 4, 16, 16
    x = jax.random.normal(k_x, (N, C, H, W), dtype=jnp.float32)

    # reset_parameters(): weight ~ U[0,1), bias = 0  (deterministic synthetic init)
    weight = jax.random.uniform(k_w, (C,), dtype=jnp.float32)
    bias = jnp.zeros((C,), dtype=jnp.float32)

    fn = jax.jit(batch_layer_norm)
    out = jax.block_until_ready(fn(x, weight, bias))

    ref = batch_layer_norm_ref(x, weight, bias)
    assert out.shape == (N, C, H, W)
    assert jnp.allclose(out, ref, atol=1e-5, rtol=1e-5), "mismatch vs reference"

    print("KERNEL_OK")
</pallas_src>

<mosaic_0001>
module attributes {stable_mosaic.version = 11 : i64} {
  func.func @_stats_kernel(%arg0: i32, %arg1: memref<8x256xf32, #tpu.memory_space<vmem>>, %arg2: memref<1x1x128xf32, #tpu.memory_space<vmem>>, %arg3: memref<1x1x128xf32, #tpu.memory_space<vmem>>) attributes {dimension_semantics = [#tpu.dimension_semantics<parallel>], iteration_bounds = array<i64: 1>, scalar_prefetch = 0 : i64, scratch_operands = 0 : i64, tpu.core_type = #tpu.core_type<tc>, window_params = [{transform_indices = @transform_0, window_bounds = array<i64: 8, 256>}, {transform_indices = @transform_1, window_bounds = array<i64: 1, 1, 128>}, {transform_indices = @transform_2, window_bounds = array<i64: 1, 1, 128>}]} {
    %c0 = arith.constant 0 : index
    %c0_0 = arith.constant 0 : index
    %0 = vector.load %arg1[%c0, %c0_0] : memref<8x256xf32, #tpu.memory_space<vmem>>, vector<8x256xf32>
    %1 = vector.shape_cast %0 : vector<8x256xf32> to vector<1x8x256xf32>
    %cst = arith.constant dense<0.000000e+00> : vector<1xf32>
    %2 = vector.multi_reduction <add>, %1, %cst [1, 2] : vector<1x8x256xf32> to vector<1xf32>
    %3 = vector.shape_cast %2 : vector<1xf32> to vector<1x1x1xf32>
    %4 = vector.extract %3[0, 0, 0] : f32 from vector<1x1x1xf32>
    %5 = arith.mulf %0, %0 : vector<8x256xf32>
    %6 = vector.shape_cast %5 : vector<8x256xf32> to vector<1x8x256xf32>
    %cst_1 = arith.constant dense<0.000000e+00> : vector<1xf32>
    %7 = vector.multi_reduction <add>, %6, %cst_1 [1, 2] : vector<1x8x256xf32> to vector<1xf32>
    %8 = vector.shape_cast %7 : vector<1xf32> to vector<1x1x1xf32>
    %9 = vector.extract %8[0, 0, 0] : f32 from vector<1x1x1xf32>
    %10 = vector.broadcast %4 : f32 to vector<1x1x128xf32>
    %c0_2 = arith.constant 0 : index
    %c0_3 = arith.constant 0 : index
    %c0_4 = arith.constant 0 : index
    %11 = vector.load %arg2[%c0_2, %c0_3, %c0_4] : memref<1x1x128xf32, #tpu.memory_space<vmem>>, vector<1x1x128xf32>
    tpu.vector_store %arg2[%c0_2, %c0_3, %c0_4], %10 {strides = array<i32>} : memref<1x1x128xf32, #tpu.memory_space<vmem>>, vector<1x1x128xf32>,
    %12 = vector.broadcast %9 : f32 to vector<1x1x128xf32>
    %c0_5 = arith.constant 0 : index
    %c0_6 = arith.constant 0 : index
    %c0_7 = arith.constant 0 : index
    %13 = vector.load %arg3[%c0_5, %c0_6, %c0_7] : memref<1x1x128xf32, #tpu.memory_space<vmem>>, vector<1x1x128xf32>
    tpu.vector_store %arg3[%c0_5, %c0_6, %c0_7], %12 {strides = array<i32>} : memref<1x1x128xf32, #tpu.memory_space<vmem>>, vector<1x1x128xf32>,
    return
  }
  func.func @transform_0(%arg0: i32) -> (i32, i32) {
    %c0_i32 = arith.constant 0 : i32
    %c0_i32_0 = arith.constant 0 : i32
    return %arg0, %c0_i32 : i32, i32
  }
  func.func @transform_1(%arg0: i32) -> (i32, i32, i32) {
    %c0_i32 = arith.constant 0 : i32
    %c0_i32_0 = arith.constant 0 : i32
    %c0_i32_1 = arith.constant 0 : i32
    return %arg0, %c0_i32, %c0_i32_0 : i32, i32, i32
  }
  func.func @transform_2(%arg0: i32) -> (i32, i32, i32) {
    %c0_i32 = arith.constant 0 : i32
    %c0_i32_0 = arith.constant 0 : i32
    %c0_i32_1 = arith.constant 0 : i32
    return %arg0, %c0_i32, %c0_i32_0 : i32, i32, i32
  }
}

module attributes {stable_mosaic.version = 11 : i64} {
  func.func @_norm_kernel(%arg0: i32, %arg1: memref<8x256xf32, #tpu.memory_space<vmem>>, %arg2: memref<8x1xf32, #tpu.memory_space<vmem>>, %arg3: memref<8x1xf32, #tpu.memory_space<vmem>>, %arg4: memref<8x256xf32, #tpu.memory_space<vmem>>) attributes {dimension_semantics = [#tpu.dimension_semantics<parallel>], iteration_bounds = array<i64: 1>, scalar_prefetch = 0 : i64, scratch_operands = 0 : i64, tpu.core_type = #tpu.core_type<tc>, window_params = [{transform_indices = @transform_0, window_bounds = array<i64: 8, 256>}, {transform_indices = @transform_1, window_bounds = array<i64: 8, 1>}, {transform_indices = @transform_2, window_bounds = array<i64: 8, 1>}, {transform_indices = @transform_3, window_bounds = array<i64: 8, 256>}]} {
    %c0 = arith.constant 0 : index
    %c0_0 = arith.constant 0 : index
    %0 = vector.load %arg1[%c0, %c0_0] : memref<8x256xf32, #tpu.memory_space<vmem>>, vector<8x256xf32>
    %c0_1 = arith.constant 0 : index
    %c0_2 = arith.constant 0 : index
    %1 = vector.load %arg2[%c0_1, %c0_2] : memref<8x1xf32, #tpu.memory_space<vmem>>, vector<8x1xf32>
    %2 = vector.broadcast %1 : vector<8x1xf32> to vector<8x256xf32>
    %3 = arith.mulf %0, %2 : vector<8x256xf32>
    %c0_3 = arith.constant 0 : index
    %c0_4 = arith.constant 0 : index
    %4 = vector.load %arg3[%c0_3, %c0_4] : memref<8x1xf32, #tpu.memory_space<vmem>>, vector<8x1xf32>
    %5 = vector.broadcast %4 : vector<8x1xf32> to vector<8x256xf32>
    %6 = arith.addf %3, %5 : vector<8x256xf32>
    %c0_5 = arith.constant 0 : index
    %c0_6 = arith.constant 0 : index
    %7 = vector.load %arg4[%c0_5, %c0_6] : memref<8x256xf32, #tpu.memory_space<vmem>>, vector<8x256xf32>
    tpu.vector_store %arg4[%c0_5, %c0_6], %6 {strides = array<i32>} : memref<8x256xf32, #tpu.memory_space<vmem>>, vector<8x256xf32>,
    return
  }
  func.func @transform_0(%arg0: i32) -> (i32, i32) {
    %c0_i32 = arith.constant 0 : i32
    %c0_i32_0 = arith.constant 0 : i32
    return %arg0, %c0_i32 : i32, i32
  }
  func.func @transform_1(%arg0: i32) -> (i32, i32) {
    %c0_i32 = arith.constant 0 : i32
    %c0_i32_0 = arith.constant 0 : i32
    return %arg0, %c0_i32 : i32, i32
  }
  func.func @transform_2(%arg0: i32) -> (i32, i32) {
    %c0_i32 = arith.constant 0 : i32
    %c0_i32_0 = arith.constant 0 : i32
    return %arg0, %c0_i32 : i32, i32
  }
  func.func @transform_3(%arg0: i32) -> (i32, i32) {
    %c0_i32 = arith.constant 0 : i32
    %c0_i32_0 = arith.constant 0 : i32
    return %arg0, %c0_i32 : i32, i32
  }
}

</mosaic_0001>

<llo_original>
// kernel: tile.18
$region0: #{tile.18}
  #allocation0 [shape = 's32[1]{0}', space=sflag, size = 0x4, scoped, tag = 'scoped memory for tile.18']
  %s0 = inlined_call_operand.vmem [shape: f32[4], index: 0, kind: input, shape index: {}]
  %s1 = inlined_call_operand.vmem [shape: f32[2,4], index: 1, kind: output, shape index: {}]
  // Predicated region
  $region2: #{tile.18} parent=0 // pred_check
    _
  $region3: #{tile.18} parent=0 // pred_check_branch
    %3 = sbr.rel (0) target = $region5
  $region4: #{tile.18} parent=0 // pred_region
    _
  $region5: #{tile.18} parent=0 // pred_fallthru
    _
  %v4 = vld [vmem:[%s0] ss:$0 sm:$0xff]
  %5 = vst [vmem:[%s1] sm:$0x3] %v4

// kernel: tile.0
$region0: #{tile.0}
  %s0 = inlined_call_operand.vmem [shape: f32[2,4], index: 0, kind: input, shape index: {}]
  %s1 = inlined_call_operand.vmem [shape: f32[8,1], index: 1, kind: output, shape index: {}]
  $region1: #{tile.0} parent=0
    #allocation0 [shape = 'u8[4096]{0}', space=vmem, size = 0x1000, scoped, tag = 'scoped mem for input reshape']
    %s3 = ssub.s32 4, 1
    %v4 = vld [vmem:[%s0] sm:%s3]
    %5 = vst [vmem:[#allocation0] sm:%s3] %v4
    %v6 = vld [vmem:[#allocation0] sm:$0x3]
    %vm7 = vcmask 7168
    %8 = vst.msk [vmem:[%s1] ss:$4 sm:$0x3] %vm7, %v6
    %v9 = vld [vmem:[#allocation0] sm:$0x3]
    %10 = vrot.lane.b32.xlu0 %v9, 127
    %v11 = vpop.permute.xlu0 %10
    %vm12 = vcmask 7168
    %s13 = scalar_lea.vmem %s1, 1
    %14 = vst.msk [vmem:[%s13] ss:$4 sm:$0x3] %vm12, %v11
    %v15 = vld [vmem:[#allocation0] sm:$0x3]
    %16 = vrot.lane.b32.xlu0 %v15, 126
    %v17 = vpop.permute.xlu0 %16
    %vm18 = vcmask 7168
    %s19 = scalar_lea.vmem %s1, 2
    %20 = vst.msk [vmem:[%s19] ss:$4 sm:$0x3] %vm18, %v17
    %v21 = vld [vmem:[#allocation0] sm:$0x3]
    %22 = vrot.lane.b32.xlu0 %v21, 125
    %v23 = vpop.permute.xlu0 %22
    %vm24 = vcmask 7168
    %s25 = scalar_lea.vmem %s1, 3
    %26 = vst.msk [vmem:[%s25] ss:$4 sm:$0x3] %vm24, %v23

// kernel: batch_layer_norm.3
$region0: #{batch_layer_norm.3}
  #allocation0 [shape = 'u32[]', space=smem, size = 0x4, offset = 0x4, fixed_abs, tag = 'smem constant byte address 0x4 - core index']
  #allocation1 [shape = 'u32[72,128]{1,0:T(1,128)}', space=vmem, size = 0x9000, scoped, tag = 'internal scratch']
  %s0 = inlined_call_operand.vmem [shape: f32[8,256], index: 0, kind: input, shape index: {}]
  %s1 = inlined_call_operand.vmem [shape: f32[8,1], index: 1, kind: input, shape index: {}]
  %s2 = inlined_call_operand.vmem [shape: f32[8,1], index: 2, kind: input, shape index: {}]
  %s3 = inlined_call_operand.vmem [shape: f32[8,256], index: 3, kind: output, shape index: {}]
  %s4 = sld [smem:[#allocation0]]
  $region22: #{batch_layer_norm.3} parent=0
    _
  %s6 = ssub.s32 1, %s4
  %s7 = scalar_select 0, %s6, %s4
  // Predicated region
  $region2: #{batch_layer_norm.3} parent=0 // pred_check
    _
  $region3: #{batch_layer_norm.3} parent=0 // pred_check_branch
    %9 = sbr.rel (0) target = $region5
  $region4: #{batch_layer_norm.3} parent=0 // pred_region
    _
  $region5: #{batch_layer_norm.3} parent=0 // pred_fallthru
    _
  // Predicated region
  $region6: #{batch_layer_norm.3} parent=0 // pred_check
    _
  $region7: #{batch_layer_norm.3} parent=0 // pred_check_branch
    %11 = sbr.rel (0) target = $region9
  $region8: #{batch_layer_norm.3} parent=0 // pred_region
    _
  $region9: #{batch_layer_norm.3} parent=0 // pred_fallthru
    _
  // Predicated region
  $region10: #{batch_layer_norm.3} parent=0 // pred_check
    _
  $region11: #{batch_layer_norm.3} parent=0 // pred_check_branch
    %13 = sbr.rel (0) target = $region13
  $region12: #{batch_layer_norm.3} parent=0 // pred_region
    _
  $region13: #{batch_layer_norm.3} parent=0 // pred_fallthru
    _
  %v14 = vld [vmem:[%s0] sm:$0xff]
  %v15 = vld [vmem:[%s0 + $0x8] sm:$0xff]
  %v16 = vld [vmem:[%s1] sm:$0xff]
  %18 = vset.pattern.permute.xlu0 0
  %19 = vperm.xlu0 %18, %v16
  %v20 = vpop.permute.xlu0 %19
  %v22 = vmul.f32 %v14, %v20
  %v23 = vmul.f32 %v15, %v20
  %v24 = vld [vmem:[%s2] sm:$0xff]
  %26 = vset.pattern.permute.xlu0 0
  %27 = vperm.xlu0 %26, %v24
  %v28 = vpop.permute.xlu0 %27
  %v30 = vadd.f32 %v22, %v28
  %v31 = vadd.f32 %v23, %v28
  %32 = vst [vmem:[%s3] sm:$0xff] %v30
  %33 = vst [vmem:[%s3 + $0x8] sm:$0xff] %v31
  // Predicated region
  $region14: #{batch_layer_norm.3} parent=0 // pred_check
    _
  $region15: #{batch_layer_norm.3} parent=0 // pred_check_branch
    %35 = sbr.rel (0) target = $region17
  $region16: #{batch_layer_norm.3} parent=0 // pred_region
    _
  $region17: #{batch_layer_norm.3} parent=0 // pred_fallthru
    _
  // Predicated region
  $region18: #{batch_layer_norm.3} parent=0 // pred_check
    _
  $region19: #{batch_layer_norm.3} parent=0 // pred_check_branch
    %37 = sbr.rel (0) target = $region21
  $region20: #{batch_layer_norm.3} parent=0 // pred_region
    _
  $region21: #{batch_layer_norm.3} parent=0 // pred_fallthru
    _

// kernel: batch_layer_norm.2
$region0: #{batch_layer_norm.2}
  #allocation0 [shape = 'u32[]', space=smem, size = 0x4, offset = 0x4, fixed_abs, tag = 'smem constant byte address 0x4 - core index']
  #allocation1 [shape = 'u32[72,128]{1,0:T(1,128)}', space=vmem, size = 0x9000, scoped, tag = 'internal scratch']
  %s0 = inlined_call_operand.vmem [shape: f32[8,256], index: 0, kind: input, shape index: {}]
  %s1 = inlined_call_operand.vmem [shape: f32[1,1,128], index: 1, kind: output, shape index: {0}]
  %s2 = inlined_call_operand.vmem [shape: f32[1,1,128], index: 2, kind: output, shape index: {1}]
  %3 = xla_tuple %s1, %s2
  %s4 = sld [smem:[#allocation0]]
  $region22: #{batch_layer_norm.2} parent=0
    _
  %s6 = ssub.s32 1, %s4
  %s7 = scalar_select 0, %s6, %s4
  // Predicated region
  $region2: #{batch_layer_norm.2} parent=0 // pred_check
    _
  $region3: #{batch_layer_norm.2} parent=0 // pred_check_branch
    %9 = sbr.rel (0) target = $region5
  $region4: #{batch_layer_norm.2} parent=0 // pred_region
    _
  $region5: #{batch_layer_norm.2} parent=0 // pred_fallthru
    _
  %v10 = vld [vmem:[%s0] sm:$0xff]
  %v11 = vld [vmem:[%s0 + $0x8] sm:$0xff]
  %v12 = vadd.f32 %v10, %v11
  %13 = vadd.xlane.f32.xlu0 %v12
  %v14 = vpop.xlane.xlu0 %13
  %v15 = vrot.slane %v14, 4
  %v16 = vadd.f32 %v14, %v15
  %v17 = vrot.slane %v16, 2
  %v18 = vadd.f32 %v16, %v17
  %v19 = vrot.slane %v18, 1
  %v20 = vadd.f32 %v18, %v19
  %s21 = vtos %v20
  %v22 = vmul.f32 %v10, %v10
  %v23 = vmul.f32 %v11, %v11
  %v24 = vadd.f32 %v22, %v23
  %25 = vadd.xlane.f32.xlu0 %v24
  %v26 = vpop.xlane.xlu0 %25
  %v27 = vrot.slane %v26, 4
  %v28 = vadd.f32 %v26, %v27
  %v29 = vrot.slane %v28, 2
  %v30 = vadd.f32 %v28, %v29
  %v31 = vrot.slane %v30, 1
  %v32 = vadd.f32 %v30, %v31
  %s33 = vtos %v32
  %v34 = vstv %s21
  %35 = vst [vmem:[%s1] sm:$0x1] %v34
  %v36 = vstv %s33
  %37 = vst [vmem:[%s2] sm:$0x1] %v36
  // Predicated region
  $region6: #{batch_layer_norm.2} parent=0 // pred_check
    _
  $region7: #{batch_layer_norm.2} parent=0 // pred_check_branch
    %39 = sbr.rel (0) target = $region9
  $region8: #{batch_layer_norm.2} parent=0 // pred_region
    _
  $region9: #{batch_layer_norm.2} parent=0 // pred_fallthru
    _
  // Predicated region
  $region10: #{batch_layer_norm.2} parent=0 // pred_check
    _
  $region11: #{batch_layer_norm.2} parent=0 // pred_check_branch
    %41 = sbr.rel (0) target = $region13
  $region12: #{batch_layer_norm.2} parent=0 // pred_region
    _
  $region13: #{batch_layer_norm.2} parent=0 // pred_fallthru
    _
  // Predicated region
  $region14: #{batch_layer_norm.2} parent=0 // pred_check
    _
  $region15: #{batch_layer_norm.2} parent=0 // pred_check_branch
    %43 = sbr.rel (0) target = $region17
  $region16: #{batch_layer_norm.2} parent=0 // pred_region
    _
  $region17: #{batch_layer_norm.2} parent=0 // pred_fallthru
    _
  // Predicated region
  $region18: #{batch_layer_norm.2} parent=0 // pred_check
    _
  $region19: #{batch_layer_norm.2} parent=0 // pred_check_branch
    %45 = sbr.rel (0) target = $region21
  $region20: #{batch_layer_norm.2} parent=0 // pred_region
    _
  $region21: #{batch_layer_norm.2} parent=0 // pred_fallthru
    _

</llo_original>
